<compile_context>
chip_gen: v5e
topology: v5e:2x2
jax: 0.10.0
libtpu: 0.0.40
codegen_flags: <defaults>
</compile_context>

<pallas_src>
import jax
import jax.numpy as jnp
from jax import lax
from jax.experimental import pallas as pl
from jax.experimental.pallas import tpu as pltpu


# -------------------------- config (small synthetic shapes) --------------------------
BZ = 2            # batch
C = 3             # RGB channels
T = 4             # clip_len
H = W = 16        # spatial
PATCH = 8         # ViT patch size (stand-in)
NUM_PATCH = (H // PATCH) * (W // PATCH)      # 4 patches / frame
WIDTH = 64        # encoder width (stand-in for ViT width 768)
EMBED = 32        # CLIP embedding dim (stand-in for 512)
NUM_CLS = 10      # number of action classes
NUM_PROMPTS = 4   # stand-in for the 28 text-prompt templates

N_FRAMES = BZ * T
PATCH_DIM = C * PATCH * PATCH                # 192

LANE = 128
PATCH_DIM_PAD = ((PATCH_DIM + LANE - 1) // LANE) * LANE   # 256 (unmasked K feed)
EMBED_PAD = ((EMBED + LANE - 1) // LANE) * LANE           # 128
NUM_CLS_PAD = ((NUM_CLS + LANE - 1) // LANE) * LANE       # 128


# ----------------------------------- Pallas kernel -----------------------------------
def _clip_video_kernel(pooled_ref, w_comb_ref, b_comb_ref, cls_scaled_ref, out_ref):
    """Whole forward hot path in one kernel (all operands fit in VMEM at these sizes).

    pooled     : [N_FRAMES, PATCH_DIM_PAD]   bf16  per-frame mean of unfolded patches
    w_comb     : [PATCH_DIM_PAD, EMBED_PAD]  bf16  w_patch @ w_proj (folded on host)
    b_comb     : [1, EMBED_PAD]              f32   b_patch @ w_proj (folded on host)
    cls_scaled : [EMBED_PAD, NUM_CLS_PAD]    bf16  exp(logit_scale) * dynamic_classifier.T
    out        : [BZ, NUM_CLS_PAD]           f32
    """
    # --- synthetic encode_image collapsed to a single MXU pass (f32 accumulate) ---
    feat = jnp.dot(pooled_ref[...], w_comb_ref[...],
                   preferred_element_type=jnp.float32) + b_comb_ref[...]
    # [N_FRAMES, EMBED_PAD]

    # --- img_encode /= img_encode.norm(dim=-1, keepdim=True)  (rsqrt -> EUP slot) ---
    # NOTE: no epsilon, matching the PyTorch module (an all-zero row NaNs in both).
    inv_norm = lax.rsqrt(jnp.sum(feat * feat, axis=-1, keepdims=True))
    feat = feat * inv_norm

    # --- temporal mean hoisted before the classifier matmul (exact: norm is per-frame,
    #     matmul/mean are linear).  Static sublane slices, no reshape. ---
    mean_rows = [
        jnp.sum(feat[b * T:(b + 1) * T, :], axis=0, keepdims=True) for b in range(BZ)
    ]
    mean_feat = jnp.concatenate(mean_rows, axis=0) * (1.0 / T)   # [BZ, EMBED_PAD]

    # --- pred = (logit_scale.exp() folded into cls) : mean_feat @ cls_scaled ---
    out_ref[...] = jnp.dot(mean_feat.astype(jnp.bfloat16), cls_scaled_ref[...],
                           preferred_element_type=jnp.float32)   # [BZ, NUM_CLS_PAD]


def _pad2d(a, rows, cols, dtype):
    a = a.astype(dtype)
    return jnp.pad(a, ((0, rows - a.shape[0]), (0, cols - a.shape[1])))


@jax.jit
def basic_clip_video_forward(x, params):
    """x: [BZ, C, T, H, W] float32 video clip (PyTorch layout)."""
    bz, c, t, h, w = x.shape
    # x.permute(0, 2, 1, 3, 4).reshape(bz*t, c, h, w)
    frames = jnp.transpose(x, (0, 2, 1, 3, 4)).reshape(bz * t, c, h, w)
    # unfold into non-overlapping P x P patches, channel-major within a patch
    # (matches Conv2d weight.reshape(width, -1)); pool over patches in f32 HERE so the
    # mean fuses with the transpose chain and the kernel never sees the full patch set.
    patches = frames.reshape(bz * t, c, h // PATCH, PATCH, w // PATCH, PATCH)
    patches = jnp.transpose(patches, (0, 2, 4, 1, 3, 5))          # [N, hp, wp, C, P, P]
    patches = patches.reshape(bz * t, NUM_PATCH, PATCH_DIM)
    pooled = jnp.mean(patches, axis=1)                            # [N_FRAMES, PATCH_DIM] f32
    pooled = _pad2d(pooled, N_FRAMES, PATCH_DIM_PAD, jnp.bfloat16)

    # fold the two linear encoder stages into one weight/bias (f32, then cast); zero
    # lane-padding is exact and sliced off the output below.
    w_comb_f32 = params["w_patch"] @ params["w_proj"]             # [PATCH_DIM, EMBED]
    b_comb_f32 = params["b_patch"] @ params["w_proj"]             # [1, EMBED]
    w_comb = _pad2d(w_comb_f32, PATCH_DIM_PAD, EMBED_PAD, jnp.bfloat16)
    b_comb = _pad2d(b_comb_f32, 1, EMBED_PAD, jnp.float32)
    # exp(logit_scale) folded into the classifier weights (relative bf16 precision is
    # unchanged by a global scale).
    cls_scaled = jnp.exp(params["logit_scale"][0, 0]) * params["cls_t"]
    cls_scaled = _pad2d(cls_scaled, EMBED_PAD, NUM_CLS_PAD, jnp.bfloat16)

    out = pl.pallas_call(
        _clip_video_kernel,
        out_shape=jax.ShapeDtypeStruct((BZ, NUM_CLS_PAD), jnp.float32),
        in_specs=[
            pl.BlockSpec(memory_space=pltpu.MemorySpace.VMEM),    # pooled
            pl.BlockSpec(memory_space=pltpu.MemorySpace.VMEM),    # w_comb
            pl.BlockSpec(memory_space=pltpu.MemorySpace.VMEM),    # b_comb
            pl.BlockSpec(memory_space=pltpu.MemorySpace.VMEM),    # cls_scaled
        ],
        out_specs=pl.BlockSpec(memory_space=pltpu.MemorySpace.VMEM),
    )(pooled, w_comb, b_comb, cls_scaled)
    return out[:, :NUM_CLS]


# ------------------------- deterministic parameter construction ----------------------
def make_params(key):
    ks = jax.random.split(key, 4)
    w_patch = jax.random.normal(ks[0], (PATCH_DIM, WIDTH), jnp.float32) * 0.02
    b_patch = jax.random.normal(ks[1], (1, WIDTH), jnp.float32) * 0.02
    w_proj = jax.random.normal(ks[2], (WIDTH, EMBED), jnp.float32) * 0.02

    # achieve_csf_matrix: per-prompt text features, unit-norm each, mean, renorm (JAX glue)
    prompts = jax.random.normal(ks[3], (NUM_PROMPTS, NUM_CLS, EMBED), jnp.float32)
    prompts = prompts / jnp.linalg.norm(prompts, axis=-1, keepdims=True)
    csf = prompts.mean(0)
    csf = csf / jnp.linalg.norm(csf, axis=-1, keepdims=True)      # [NUM_CLS, EMBED]

    # CLIP default logit_scale init = ln(1/0.07)
    logit_scale = jnp.full((1, 1), jnp.log(1.0 / 0.07), jnp.float32)

    return {"w_patch": w_patch, "b_patch": b_patch, "w_proj": w_proj,
            "cls_t": csf.T, "logit_scale": logit_scale}


# ------------------------------------- reference --------------------------------------
def reference_forward(x, params):
    """Faithful f32 reference (embed per patch, pool, project, norm, scale, mean over T)."""
    bz, c, t, h, w = x.shape
    frames = jnp.transpose(x, (0, 2, 1, 3, 4)).reshape(bz * t, c, h, w)
    patches = frames.reshape(bz * t, c, h // PATCH, PATCH, w // PATCH, PATCH)
    patches = jnp.transpose(patches, (0, 2, 4, 1, 3, 5)).reshape(bz * t, NUM_PATCH, PATCH_DIM)
    hfeat = patches @ params["w_patch"] + params["b_patch"]
    pooled = hfeat.mean(axis=1)
    feat = pooled @ params["w_proj"]
    feat = feat / jnp.linalg.norm(feat, axis=-1, keepdims=True)
    logits = jnp.exp(params["logit_scale"][0, 0]) * (feat @ params["cls_t"])
    return logits.reshape(bz, t, NUM_CLS).mean(axis=1)


if __name__ == "__main__":
    key = jax.random.PRNGKey(0)
    k_x, k_p = jax.random.split(key)
    # forward expects x = [pathway_0]; pathway_0: [bz, C, T, H, W]
    x = jax.random.normal(k_x, (BZ, C, T, H, W), jnp.float32)
    params = make_params(k_p)

    pred = basic_clip_video_forward(x, params)
    pred = jax.block_until_ready(pred)

    ref = reference_forward(x, params)
    assert pred.shape == (BZ, NUM_CLS)
    # Kernel uses bf16 MXU operands (f32 accumulate) vs a pure-f32 reference, and the
    # logits carry exp(logit_scale) ~= 14.3, so compare with bf16-level tolerance.
    assert jnp.allclose(pred, ref, atol=1e-1, rtol=5e-2), (pred, ref)
    print("KERNEL_OK")
</pallas_src>

<mosaic_0001>
module attributes {stable_mosaic.version = 11 : i64} {
  func.func @_clip_video_kernel(%arg0: memref<8x256xbf16, #tpu.memory_space<vmem>>, %arg1: memref<256x128xbf16, #tpu.memory_space<vmem>>, %arg2: memref<1x128xf32, #tpu.memory_space<vmem>>, %arg3: memref<128x128xbf16, #tpu.memory_space<vmem>>, %arg4: memref<2x128xf32, #tpu.memory_space<vmem>>) attributes {dimension_semantics = [], scalar_prefetch = 0 : i64, scratch_operands = 0 : i64, tpu.core_type = #tpu.core_type<tc>} {
    %c0 = arith.constant 0 : index
    %c0_0 = arith.constant 0 : index
    %0 = vector.load %arg0[%c0, %c0_0] : memref<8x256xbf16, #tpu.memory_space<vmem>>, vector<8x256xbf16>
    %c0_1 = arith.constant 0 : index
    %c0_2 = arith.constant 0 : index
    %1 = vector.load %arg1[%c0_1, %c0_2] : memref<256x128xbf16, #tpu.memory_space<vmem>>, vector<256x128xbf16>
    %cst = arith.constant dense<0.000000e+00> : vector<8x128xf32>
    %2 = tpu.matmul %0, %1, %cst {dimension_numbers = #tpu.dot_dimension_numbers<[1], [0], [0], [1], [0, 0, 1, 1], [], []>} : vector<8x256xbf16>, vector<256x128xbf16>, vector<8x128xf32> -> vector<8x128xf32>
    %c0_3 = arith.constant 0 : index
    %c0_4 = arith.constant 0 : index
    %3 = vector.load %arg2[%c0_3, %c0_4] : memref<1x128xf32, #tpu.memory_space<vmem>>, vector<1x128xf32>
    %4 = vector.broadcast %3 : vector<1x128xf32> to vector<8x128xf32>
    %5 = arith.addf %2, %4 : vector<8x128xf32>
    %6 = arith.mulf %5, %5 : vector<8x128xf32>
    %cst_5 = arith.constant dense<0.000000e+00> : vector<8xf32>
    %7 = vector.multi_reduction <add>, %6, %cst_5 [1] : vector<8x128xf32> to vector<8xf32>
    %8 = vector.shape_cast %7 : vector<8xf32> to vector<8x1xf32>
    %9 = math.rsqrt %8 : vector<8x1xf32>
    %10 = vector.broadcast %9 : vector<8x1xf32> to vector<8x128xf32>
    %11 = arith.mulf %5, %10 : vector<8x128xf32>
    %12 = vector.extract_strided_slice %11 {offsets = [0, 0], sizes = [4, 128], strides = [1, 1]} : vector<8x128xf32> to vector<4x128xf32>
    %cst_6 = arith.constant dense<0.000000e+00> : vector<128xf32>
    %13 = vector.multi_reduction <add>, %12, %cst_6 [0] : vector<4x128xf32> to vector<128xf32>
    %14 = vector.shape_cast %13 : vector<128xf32> to vector<1x128xf32>
    %15 = vector.extract_strided_slice %11 {offsets = [4, 0], sizes = [4, 128], strides = [1, 1]} : vector<8x128xf32> to vector<4x128xf32>
    %cst_7 = arith.constant dense<0.000000e+00> : vector<128xf32>
    %16 = vector.multi_reduction <add>, %15, %cst_7 [0] : vector<4x128xf32> to vector<128xf32>
    %17 = vector.shape_cast %16 : vector<128xf32> to vector<1x128xf32>
    %18 = tpu.concatenate %14, %17 in 0 : vector<1x128xf32>, vector<1x128xf32> -> vector<2x128xf32>
    %cst_8 = arith.constant 2.500000e-01 : f32
    %19 = vector.broadcast %cst_8 : f32 to vector<2x128xf32>
    %20 = arith.mulf %18, %19 : vector<2x128xf32>
    %21 = arith.truncf %20 : vector<2x128xf32> to vector<2x128xbf16>
    %c0_9 = arith.constant 0 : index
    %c0_10 = arith.constant 0 : index
    %22 = vector.load %arg3[%c0_9, %c0_10] : memref<128x128xbf16, #tpu.memory_space<vmem>>, vector<128x128xbf16>
    %cst_11 = arith.constant dense<0.000000e+00> : vector<2x128xf32>
    %23 = tpu.matmul %21, %22, %cst_11 {dimension_numbers = #tpu.dot_dimension_numbers<[1], [0], [0], [1], [0, 0, 1, 1], [], []>} : vector<2x128xbf16>, vector<128x128xbf16>, vector<2x128xf32> -> vector<2x128xf32>
    %c0_12 = arith.constant 0 : index
    %c0_13 = arith.constant 0 : index
    %24 = vector.load %arg4[%c0_12, %c0_13] : memref<2x128xf32, #tpu.memory_space<vmem>>, vector<2x128xf32>
    tpu.vector_store %arg4[%c0_12, %c0_13], %23 {strides = array<i32>} : memref<2x128xf32, #tpu.memory_space<vmem>>, vector<2x128xf32>,
    return
  }
}

</mosaic_0001>

<llo_original>
// kernel: basic_clip_video_forward.1
$region0: #{basic_clip_video_forward.1}
  #allocation0 [shape = 'u32[]', space=smem, size = 0x4, offset = 0x4, fixed_abs, tag = 'smem constant byte address 0x4 - core index']
  #allocation1 [shape = 'u32[72,128]{1,0:T(1,128)}', space=vmem, size = 0x9000, scoped, tag = 'internal scratch']
  %s0 = inlined_call_operand.vmem [shape: bf16[8,256], index: 0, kind: input, shape index: {}]
  %s1 = inlined_call_operand.vmem [shape: bf16[256,128], index: 1, kind: input, shape index: {}]
  %s2 = inlined_call_operand.vmem [shape: f32[1,128], index: 2, kind: input, shape index: {}]
  %s3 = inlined_call_operand.vmem [shape: bf16[128,128], index: 3, kind: input, shape index: {}]
  %s4 = inlined_call_operand.hbm [shape: f32[2,128], index: 4, kind: output, shape index: {}]
  %s5 = sld [smem:[#allocation0]]
  $region26: #{basic_clip_video_forward.1} parent=0
    _
  %s7 = ssub.s32 1, %s5
  %s8 = scalar_select 0, %s7, %s5
  $region1: #{basic_clip_video_forward.1} parent=0
    #allocation2 [shape = 'u8[1024]{0}', space=vmem, size = 0x400, scoped, tag = 'output window, operand 0, single buffered']
    #allocation3 [shape = 's32[1]{0}', space=sflag, size = 0x4, scoped, tag = 'scoped memory for basic_clip_video_forward.1']
    %9 = vsyncpa [#allocation3], 0
    // Predicated region
    $region2: #{basic_clip_video_forward.1} parent=1 // pred_check
      _
    $region3: #{basic_clip_video_forward.1} parent=1 // pred_check_branch
      %11 = sbr.rel (0) target = $region5
    $region4: #{basic_clip_video_forward.1} parent=1 // pred_region
      _
    $region5: #{basic_clip_video_forward.1} parent=1 // pred_fallthru
      _
    // Predicated region
    $region6: #{basic_clip_video_forward.1} parent=1 // pred_check
      _
    $region7: #{basic_clip_video_forward.1} parent=1 // pred_check_branch
      %13 = sbr.rel (0) target = $region9
    $region8: #{basic_clip_video_forward.1} parent=1 // pred_region
      _
    $region9: #{basic_clip_video_forward.1} parent=1 // pred_fallthru
      _
    // Predicated region
    $region10: #{basic_clip_video_forward.1} parent=1 // pred_check
      _
    $region11: #{basic_clip_video_forward.1} parent=1 // pred_check_branch
      %15 = sbr.rel (0) target = $region13
    $region12: #{basic_clip_video_forward.1} parent=1 // pred_region
      _
    $region13: #{basic_clip_video_forward.1} parent=1 // pred_fallthru
      _
    // Predicated region
    $region14: #{basic_clip_video_forward.1} parent=1 // pred_check
      _
    $region15: #{basic_clip_video_forward.1} parent=1 // pred_check_branch
      %17 = sbr.rel (0) target = $region17
    $region16: #{basic_clip_video_forward.1} parent=1 // pred_region
      _
    $region17: #{basic_clip_video_forward.1} parent=1 // pred_fallthru
      _
    %v18 = vld [vmem:[%s0] sm:$0xff]
    %v19 = vld [vmem:[%s1] sm:$0xf]
    %v20 = vld [vmem:[%s1 + $0x4] sm:$0xf]
    %v21 = vld [vmem:[%s1 + $0x8] sm:$0xf]
    %v22 = vld [vmem:[%s1 + $0xc] sm:$0xf]
    %v23 = vld [vmem:[%s1 + $0x10] sm:$0xf]
    %v24 = vld [vmem:[%s1 + $0x14] sm:$0xf]
    %v25 = vld [vmem:[%s1 + $0x18] sm:$0xf]
    %v26 = vld [vmem:[%s1 + $0x1c] sm:$0xf]
    %v27 = vld [vmem:[%s1 + $0x20] sm:$0xf]
    %v28 = vld [vmem:[%s1 + $0x24] sm:$0xf]
    %v29 = vld [vmem:[%s1 + $0x28] sm:$0xf]
    %v30 = vld [vmem:[%s1 + $0x2c] sm:$0xf]
    %v31 = vld [vmem:[%s1 + $0x30] sm:$0xf]
    %v32 = vld [vmem:[%s1 + $0x34] sm:$0xf]
    %v33 = vld [vmem:[%s1 + $0x38] sm:$0xf]
    %v34 = vld [vmem:[%s1 + $0x3c] sm:$0xf]
    %v35 = vld [vmem:[%s1 + $0x40] sm:$0xf]
    %v36 = vld [vmem:[%s1 + $0x44] sm:$0xf]
    %v37 = vld [vmem:[%s1 + $0x48] sm:$0xf]
    %v38 = vld [vmem:[%s1 + $0x4c] sm:$0xf]
    %v39 = vld [vmem:[%s1 + $0x50] sm:$0xf]
    %v40 = vld [vmem:[%s1 + $0x54] sm:$0xf]
    %v41 = vld [vmem:[%s1 + $0x58] sm:$0xf]
    %v42 = vld [vmem:[%s1 + $0x5c] sm:$0xf]
    %v43 = vld [vmem:[%s1 + $0x60] sm:$0xf]
    %v44 = vld [vmem:[%s1 + $0x64] sm:$0xf]
    %v45 = vld [vmem:[%s1 + $0x68] sm:$0xf]
    %v46 = vld [vmem:[%s1 + $0x6c] sm:$0xf]
    %v47 = vld [vmem:[%s1 + $0x70] sm:$0xf]
    %v48 = vld [vmem:[%s1 + $0x74] sm:$0xf]
    %v49 = vld [vmem:[%s1 + $0x78] sm:$0xf]
    %v50 = vld [vmem:[%s1 + $0x7c] sm:$0xf]
    %v51 = vld [vmem:[%s2] sm:$0x1]
    %v53 = vperm.slane %v51, 0
    %v56 = vunpack.c.l.b16 %v18
    %v57 = vunpack.c.h.b16 %v18
    %v58 = vpack.c.b16 %v56, %v56
    %v59 = vpack.c.b16 %v57, %v57
    %v94 = vunpack.c.l.b16 %v19
    %v95 = vunpack.c.l.b16 %v20
    %v96 = vunpack.c.l.b16 %v21
    %v97 = vunpack.c.l.b16 %v22
    %v98 = vunpack.c.l.b16 %v23
    %v99 = vunpack.c.l.b16 %v24
    %v100 = vunpack.c.l.b16 %v25
    %v101 = vunpack.c.l.b16 %v26
    %v102 = vunpack.c.l.b16 %v27
    %v103 = vunpack.c.l.b16 %v28
    %v104 = vunpack.c.l.b16 %v29
    %v105 = vunpack.c.l.b16 %v30
    %v106 = vunpack.c.l.b16 %v31
    %v107 = vunpack.c.l.b16 %v32
    %v108 = vunpack.c.l.b16 %v33
    %v109 = vunpack.c.l.b16 %v34
    %v110 = vunpack.c.l.b16 %v35
    %v111 = vunpack.c.l.b16 %v36
    %v112 = vunpack.c.l.b16 %v37
    %v113 = vunpack.c.l.b16 %v38
    %v114 = vunpack.c.l.b16 %v39
    %v115 = vunpack.c.l.b16 %v40
    %v116 = vunpack.c.l.b16 %v41
    %v117 = vunpack.c.l.b16 %v42
    %v118 = vunpack.c.l.b16 %v43
    %v119 = vunpack.c.l.b16 %v44
    %v120 = vunpack.c.l.b16 %v45
    %v121 = vunpack.c.l.b16 %v46
    %v122 = vunpack.c.l.b16 %v47
    %v123 = vunpack.c.l.b16 %v48
    %v124 = vunpack.c.l.b16 %v49
    %v125 = vunpack.c.l.b16 %v50
    %v126 = vpack.c.b16 %v95, %v94
    %v127 = vpack.c.b16 %v97, %v96
    %v128 = vpack.c.b16 %v99, %v98
    %v129 = vpack.c.b16 %v101, %v100
    %v130 = vpack.c.b16 %v103, %v102
    %v131 = vpack.c.b16 %v105, %v104
    %v132 = vpack.c.b16 %v107, %v106
    %v133 = vpack.c.b16 %v109, %v108
    %v134 = vpack.c.b16 %v111, %v110
    %v135 = vpack.c.b16 %v113, %v112
    %v136 = vpack.c.b16 %v115, %v114
    %v137 = vpack.c.b16 %v117, %v116
    %v138 = vpack.c.b16 %v119, %v118
    %v139 = vpack.c.b16 %v121, %v120
    %v140 = vpack.c.b16 %v123, %v122
    %v141 = vpack.c.b16 %v125, %v124
    %158 = vmatpush.bf16.msra.mxu0 %v133
    %159 = vmatpush.bf16.msra.mxu0 %v132
    %160 = vmatpush.bf16.msra.mxu0 %v131
    %161 = vmatpush.bf16.msra.mxu0 %v130
    %162 = vmatpush.bf16.msra.mxu0 %v129
    %163 = vmatpush.bf16.msra.mxu0 %v128
    %164 = vmatpush.bf16.msra.mxu0 %v127
    %165 = vmatpush.bf16.msra.mxu0 %v126
    %166 = vmatmul.bf16.gmra.mxu0 %v58
    %v167 = vpop.f32.mrf.mxu0
    %v168 = vadd.f32 %v53, %v167
    %v169 = vpop.f32.mrf.mxu0
    %170 = vdwg.mxu0
    %171 = vmatpush.bf16.msra.mxu0 %v141
    %172 = vmatpush.bf16.msra.mxu0 %v140
    %173 = vmatpush.bf16.msra.mxu0 %v139
    %174 = vmatpush.bf16.msra.mxu0 %v138
    %175 = vmatpush.bf16.msra.mxu0 %v137
    %176 = vmatpush.bf16.msra.mxu0 %v136
    %177 = vmatpush.bf16.msra.mxu0 %v135
    %178 = vmatpush.bf16.msra.mxu0 %v134
    %179 = vmatmul.bf16.gmra.mxu0 %v59
    %v180 = vpop.f32.mrf.mxu0
    %v181 = vadd.f32 %v168, %v180
    %v182 = vpop.f32.mrf.mxu0
    %183 = vdwg.mxu0
    %v184 = vmul.f32 %v181, %v181
    %185 = vadd.xlane.f32.xlu0 %v184
    %v186 = vpop.xlane.xlu0 %185
    %v187 = vrsqrt.pop %v186
    %v188 = vmul.f32 %v187, %v186
    %v189 = vmul.f32 %v188, %v187
    %v190 = vmul.f32 0.5, %v189
    %v191 = vsub.f32 1.5, %v190
    %v192 = vmul.f32 %v187, %v191
    %vm193 = vweird.f32 %v186
    %vm194 = vweird.f32 %v187
    %vm195 = vmor %vm193, %vm194
    %v196 = vsel %vm195, %v187, %v192
    %v197 = vmul.f32 %v181, %v196
    %vm198 = vcmask 1043456
    %v199 = vsel %vm198, %v197, 0.0
    %v200 = vrot.slane %v199, 4
    %v201 = vadd.f32 %v199, %v200
    %v202 = vrot.slane %v201, 2
    %v203 = vadd.f32 %v201, %v202
    %v204 = vrot.slane %v203, 1
    %v205 = vadd.f32 %v203, %v204
    %v207 = vrot.slane %v197, 4
    %v209 = vsel %vm198, %v207, 0.0
    %v210 = vrot.slane %v209, 4
    %v211 = vadd.f32 %v209, %v210
    %v212 = vrot.slane %v211, 2
    %v213 = vadd.f32 %v211, %v212
    %v214 = vrot.slane %v213, 1
    %v215 = vadd.f32 %v213, %v214
    %vm216 = vcmask 1040384
    %v217 = vsel %vm216, %v205, %v215
    %v218 = vmul.f32 %v217, 0.25
    %v219 = vpack.c.bf16 %v218, %v218
    %v220 = vld [vmem:[%s3] sm:$0xf]
    %v221 = vld [vmem:[%s3 + $0x4] sm:$0xf]
    %v222 = vld [vmem:[%s3 + $0x8] sm:$0xf]
    %v223 = vld [vmem:[%s3 + $0xc] sm:$0xf]
    %v224 = vld [vmem:[%s3 + $0x10] sm:$0xf]
    %v225 = vld [vmem:[%s3 + $0x14] sm:$0xf]
    %v226 = vld [vmem:[%s3 + $0x18] sm:$0xf]
    %v227 = vld [vmem:[%s3 + $0x1c] sm:$0xf]
    %v228 = vld [vmem:[%s3 + $0x20] sm:$0xf]
    %v229 = vld [vmem:[%s3 + $0x24] sm:$0xf]
    %v230 = vld [vmem:[%s3 + $0x28] sm:$0xf]
    %v231 = vld [vmem:[%s3 + $0x2c] sm:$0xf]
    %v232 = vld [vmem:[%s3 + $0x30] sm:$0xf]
    %v233 = vld [vmem:[%s3 + $0x34] sm:$0xf]
    %v234 = vld [vmem:[%s3 + $0x38] sm:$0xf]
    %v235 = vld [vmem:[%s3 + $0x3c] sm:$0xf]
    %v252 = vunpack.c.l.b16 %v220
    %v253 = vunpack.c.l.b16 %v221
    %v254 = vunpack.c.l.b16 %v222
    %v255 = vunpack.c.l.b16 %v223
    %v256 = vunpack.c.l.b16 %v224
    %v257 = vunpack.c.l.b16 %v225
    %v258 = vunpack.c.l.b16 %v226
    %v259 = vunpack.c.l.b16 %v227
    %v260 = vunpack.c.l.b16 %v228
    %v261 = vunpack.c.l.b16 %v229
    %v262 = vunpack.c.l.b16 %v230
    %v263 = vunpack.c.l.b16 %v231
    %v264 = vunpack.c.l.b16 %v232
    %v265 = vunpack.c.l.b16 %v233
    %v266 = vunpack.c.l.b16 %v234
    %v267 = vunpack.c.l.b16 %v235
    %v268 = vpack.c.b16 %v253, %v252
    %v269 = vpack.c.b16 %v255, %v254
    %v270 = vpack.c.b16 %v257, %v256
    %v271 = vpack.c.b16 %v259, %v258
    %v272 = vpack.c.b16 %v261, %v260
    %v273 = vpack.c.b16 %v263, %v262
    %v274 = vpack.c.b16 %v265, %v264
    %v275 = vpack.c.b16 %v267, %v266
    %284 = vmatpush.bf16.msra.mxu0 %v275
    %285 = vmatpush.bf16.msra.mxu0 %v274
    %286 = vmatpush.bf16.msra.mxu0 %v273
    %287 = vmatpush.bf16.msra.mxu0 %v272
    %288 = vmatpush.bf16.msra.mxu0 %v271
    %289 = vmatpush.bf16.msra.mxu0 %v270
    %290 = vmatpush.bf16.msra.mxu0 %v269
    %291 = vmatpush.bf16.msra.mxu0 %v268
    %292 = vmatmul.bf16.gmra.mxu0 %v219
    %v293 = vpop.f32.mrf.mxu0
    %v294 = vadd.f32 0.0, %v293
    %v295 = vpop.f32.mrf.mxu0
    %296 = vdwg.mxu0
    %297 = vst [vmem:[#allocation2] sm:$0x3] %v294
    // Predicated region
    $region18: #{basic_clip_video_forward.1} parent=1 // pred_check
      _
    $region19: #{basic_clip_video_forward.1} parent=1 // pred_check_branch
      %299 = sbr.rel (0) target = $region21
    $region20: #{basic_clip_video_forward.1} parent=1 // pred_region
      %301 = vsyncadd [#allocation3], 0
      %s303 = sshll.u32 [#allocation2], 4
      %s304 = int_to_ptr.vmem [resolvable:$true] %s303
      %s305 = sshll.u32 %s4, 4
      %s306 = int_to_ptr.hbm [resolvable:$true] %s305
      %308 = dma.vmem_to_hbm [thread:$0]  %s304, 32, %s306, [#allocation3]
    $region21: #{basic_clip_video_forward.1} parent=1 // pred_fallthru
      _
    // Predicated region
    $region22: #{basic_clip_video_forward.1} parent=1 // pred_check
      _
    $region23: #{basic_clip_video_forward.1} parent=1 // pred_check_branch
      %310 = sbr.rel (0) target = $region25
    $region24: #{basic_clip_video_forward.1} parent=1 // pred_region
      %312 = dma.done [#allocation3], 32
    $region25: #{basic_clip_video_forward.1} parent=1 // pred_fallthru
      _
    %313 = vsyncpa [#allocation3], 1

</llo_original>
